<compile_context>
chip_gen: v5e
topology: v5e:2x2
jax: 0.10.0
libtpu: 0.0.40
codegen_flags: <defaults>
</compile_context>

<pallas_src>
import functools

import jax
import jax.numpy as jnp
from jax import lax
from jax.experimental import pallas as pl
from jax.experimental.pallas import tpu as pltpu

EPS = 1e-8  # nn.CosineSimilarity default eps


def _round_up(n, m):
    return ((n + m - 1) // m) * m


def _cdiv(a, b):
    return (a + b - 1) // b


def _cosine_sim_kernel(x_ref, yt_ref, w1_ref, w2_ref, o_ref, *, eps_sq, sign):
    # x_ref : (bm, H)   tile of x rows (native dtype)
    # yt_ref: (H, bn)   column tile of y^T (native dtype)
    # w1_ref: (bm, 1)   precomputed squared norms of x rows (f32)
    # w2_ref: (1, bn)   precomputed squared norms of y rows, pre-scaled by temp^2 (f32)
    # o_ref : (bm, bn)  output tile

    # Pairwise dot products in the natural (M,K)x(K,N) MXU orientation (y transposed
    # once in the wrapper), native-dtype operands, f32 accumulation.
    w12 = jnp.dot(x_ref[...], yt_ref[...], preferred_element_type=jnp.float32)

    # cosine_similarity / temp:  w12 * rsqrt(clamp_min(w1 * (w2*temp^2), (eps*temp)^2)).
    # The clamp is on the *product* of squared norms (matches current ATen); 1/temp is
    # folded into w2 so the epilogue is one broadcast mul, one max, one EUP rsqrt, one mul.
    denom_sq = jnp.maximum(w1_ref[...] * w2_ref[...], eps_sq)
    r = w12 * lax.rsqrt(denom_sq)
    if sign != 1.0:          # only emitted when temp < 0 (sign is a trace-time constant)
        r = r * sign
    o_ref[...] = r.astype(o_ref.dtype)


def similarity(x, y, temp, *, block_rows=None, block_cols=None, out_dtype=jnp.float32):
    """Pairwise cosine similarity divided by temp.

    x: (B1, H), y: (B2, H)  ->  (B1, B2) in `out_dtype`
    Equivalent to Similarity(temp)(x[:, None, :], y[None, :, :]) in PyTorch.
    """
    b1, h = x.shape
    b2, h2 = y.shape
    assert h == h2, "feature dims must match"
    temp = float(temp)
    assert temp != 0.0, "temp must be non-zero"
    sign = 1.0 if temp > 0.0 else -1.0
    abs_temp = abs(temp)

    itemsize_x = jnp.dtype(x.dtype).itemsize
    itemsize_y = jnp.dtype(y.dtype).itemsize
    out_itemsize = jnp.dtype(out_dtype).itemsize
    # Row-tile alignment: 8 sublanes for 32-bit dtypes, 16 for bf16, 32 for 8-bit.
    row_align = 8 if itemsize_x >= 4 else 32 // itemsize_x

    # Lane-dense output: pad B2 (y rows / w2 / output columns) to a multiple of 128.
    # Padded y rows are zero -> their columns evaluate to 0 / eps = 0 and are sliced off.
    b2p = _round_up(b2, 128)
    if b2p != b2:
        y = jnp.pad(y, ((0, b2p - b2), (0, 0)))

    # Hoisted norms (f32), computed once in XLA before the grid:
    #   w1 : (b1, 1)  row squared norms of x
    #   w2s: (1, b2p) row squared norms of y, pre-scaled by temp^2 (folds /temp in)
    xf = x.astype(jnp.float32)
    w1 = jnp.sum(xf * xf, axis=-1, keepdims=True)
    yf = y.astype(jnp.float32)
    w2s = (jnp.sum(yf * yf, axis=-1, keepdims=True) * (abs_temp * abs_temp)).T
    # One-time HBM-side transpose so the kernel feeds the MXU without a per-step vxpose.
    y_t = y.T                                                       # (h, b2p)

    # --- tile selection: VMEM-budget aware, generation aware ---------------------------
    try:
        vmem_cap = int(pltpu.get_tpu_info().vmem_capacity_bytes)    # 64 MiB v7x, 128 MiB v5e/v6e
    except Exception:
        vmem_cap = 64 * 1024 * 1024                                  # conservative (v7x) fallback
    budget = vmem_cap // 2                                           # headroom for Mosaic scratch

    bm = block_rows if block_rows is not None else min(256, _round_up(b1, row_align))
    bm = min(_round_up(max(bm, 1), row_align), _round_up(b1, row_align))
    bn = block_cols if block_cols is not None else min(2048, b2p)
    bn = min(_round_up(max(bn, 1), 128), b2p)

    def _usage(m, n):
        return (2 * m * h * itemsize_x        # x tiles   (double-buffered)
                + 2 * n * h * itemsize_y      # y^T tiles (double-buffered)
                + 2 * m * 4 + 2 * n * 4       # w1 / w2 tiles
                + 2 * m * n * 4)              # f32-register-width out tiles

    if block_rows is None and block_cols is None:
        while _usage(bm, bn) > budget:
            if bn > 128 and (bn >= bm or bm <= row_align):
                bn = max(128, _round_up(bn // 2, 128))
            elif bm > row_align:
                bm = max(row_align, _round_up(bm // 2, row_align))
            else:
                break

    grid_rows = _cdiv(b1, bm)
    grid_cols = _cdiv(b2p, bn)
    # v7x has two TensorCores: make sure there are >= 2 parallel blocks when possible.
    if grid_rows * grid_cols < 2 and block_rows is None and b1 >= 2 * row_align:
        bm = _round_up(_cdiv(b1, 2), row_align)
        grid_rows = _cdiv(b1, bm)

    vmem_limit = int(min(vmem_cap, _usage(bm, bn) + (8 << 20)))

    cost = pl.CostEstimate(
        flops=2 * b1 * b2p * h,
        transcendentals=b1 * b2p,                                    # rsqrt per output element
        bytes_accessed=(b1 * h * itemsize_x
                        + grid_rows * b2p * h * itemsize_y
                        + b1 * 4 + b2p * 4
                        + b1 * b2p * out_itemsize),
    )

    kernel = functools.partial(
        _cosine_sim_kernel, eps_sq=(EPS * abs_temp) ** 2, sign=sign)

    out = pl.pallas_call(
        kernel,
        out_shape=jax.ShapeDtypeStruct((b1, b2p), out_dtype),
        grid_spec=pltpu.PrefetchScalarGridSpec(
            num_scalar_prefetch=0,
            grid=(grid_rows, grid_cols),
            in_specs=[
                pl.BlockSpec((bm, h), lambda i, j: (i, 0)),          # x row tile
                pl.BlockSpec((h, bn), lambda i, j: (0, j)),          # y^T column tile
                pl.BlockSpec((bm, 1), lambda i, j: (i, 0)),          # x row norms
                pl.BlockSpec((1, bn), lambda i, j: (0, j)),          # y row norms * temp^2
            ],
            out_specs=pl.BlockSpec((bm, bn), lambda i, j: (i, j)),
        ),
        compiler_params=pltpu.CompilerParams(
            dimension_semantics=("parallel", "parallel"),
            vmem_limit_bytes=vmem_limit,
        ),
        cost_estimate=cost,
    )(x, y_t, w1, w2s)

    return out[:, :b2] if b2p != b2 else out
    # TODO(synk): for very large (B1, B2) outputs, fuse the downstream consumer
    #             (e.g. SimCSE softmax/CE) into the kernel to avoid materializing it.


def _reference(x, y, temp):
    # Pure-JAX reference mirroring torch.nn.CosineSimilarity(dim=-1) semantics
    # (eps clamp on the product of squared norms, as in current ATen) under the
    # (B1,1,H) x (1,B2,H) broadcast.
    xf = x.astype(jnp.float32)[:, None, :]
    yf = y.astype(jnp.float32)[None, :, :]
    w12 = jnp.sum(xf * yf, axis=-1)
    w1 = jnp.sum(xf * xf, axis=-1)
    w2 = jnp.sum(yf * yf, axis=-1)
    return w12 / jnp.sqrt(jnp.maximum(w1 * w2, EPS * EPS)) / temp


if __name__ == "__main__":
    key = jax.random.PRNGKey(0)
    kx, ky, kz = jax.random.split(key, 3)

    temp = 0.05  # typical SimCSE temperature (module hyperparameter)

    # Test 1: small f32, single grid step, B2 padded 8 -> 128 and sliced back.
    B, H = 8, 32
    x = jax.random.normal(kx, (B, H), dtype=jnp.float32)
    y = jax.random.normal(ky, (B, H), dtype=jnp.float32)
    out = jax.block_until_ready(similarity(x, y, temp))
    ref = _reference(x, y, temp)
    assert out.shape == (B, B)
    assert jnp.allclose(out, ref, atol=1e-4, rtol=1e-4), "mismatch vs reference (f32)"

    # Test 2: f32, multi-step row grid with non-divisible B1 (masked tail-write path).
    B1, B2, H2 = 20, 8, 32
    x2 = jax.random.normal(kz, (B1, H2), dtype=jnp.float32)
    y2 = jax.random.normal(ky, (B2, H2), dtype=jnp.float32)
    out2 = jax.block_until_ready(similarity(x2, y2, temp, block_rows=8))
    ref2 = _reference(x2, y2, temp)
    assert out2.shape == (B1, B2)
    assert jnp.allclose(out2, ref2, atol=1e-4, rtol=1e-4), "mismatch vs reference (tail)"

    # Test 3: bf16 operands, 2-D grid (rows x column tiles), f32 output.
    B1b, B2b, Hb = 32, 300, 64
    xb = jax.random.normal(kx, (B1b, Hb), dtype=jnp.bfloat16)
    yb = jax.random.normal(kz, (B2b, Hb), dtype=jnp.bfloat16)
    out3 = jax.block_until_ready(
        similarity(xb, yb, temp, block_rows=16, block_cols=128))
    ref3 = _reference(xb, yb, temp)
    assert out3.shape == (B1b, B2b)
    assert jnp.allclose(out3, ref3, atol=5e-3, rtol=5e-3), "mismatch vs reference (bf16 in)"

    # Test 4: default tile selection + bf16 output (halved writeback traffic), loose check.
    out4 = jax.block_until_ready(similarity(xb, yb, temp, out_dtype=jnp.bfloat16))
    assert out4.shape == (B1b, B2b) and out4.dtype == jnp.bfloat16
    assert jnp.allclose(out4.astype(jnp.float32), ref3, atol=0.15, rtol=0.05), \
        "mismatch vs reference (bf16 out)"

    print("KERNEL_OK")
</pallas_src>

<mosaic_0001>
module attributes {stable_mosaic.version = 11 : i64} {
  func.func @_cosine_sim_kernel(%arg0: i32, %arg1: i32, %arg2: memref<8x32xf32, #tpu.memory_space<vmem>>, %arg3: memref<32x128xf32, #tpu.memory_space<vmem>>, %arg4: memref<8x1xf32, #tpu.memory_space<vmem>>, %arg5: memref<1x128xf32, #tpu.memory_space<vmem>>, %arg6: memref<8x128xf32, #tpu.memory_space<vmem>>) attributes {dimension_semantics = [#tpu.dimension_semantics<parallel>, #tpu.dimension_semantics<parallel>], iteration_bounds = array<i64: 1, 1>, scalar_prefetch = 0 : i64, scratch_operands = 0 : i64, tpu.core_type = #tpu.core_type<tc>, window_params = [{transform_indices = @transform_0, window_bounds = array<i64: 8, 32>}, {transform_indices = @transform_1, window_bounds = array<i64: 32, 128>}, {transform_indices = @transform_2, window_bounds = array<i64: 8, 1>}, {transform_indices = @transform_3, window_bounds = array<i64: 1, 128>}, {transform_indices = @transform_4, window_bounds = array<i64: 8, 128>}]} {
    %c0 = arith.constant 0 : index
    %c0_0 = arith.constant 0 : index
    %0 = vector.load %arg2[%c0, %c0_0] : memref<8x32xf32, #tpu.memory_space<vmem>>, vector<8x32xf32>
    %c0_1 = arith.constant 0 : index
    %c0_2 = arith.constant 0 : index
    %1 = vector.load %arg3[%c0_1, %c0_2] : memref<32x128xf32, #tpu.memory_space<vmem>>, vector<32x128xf32>
    %cst = arith.constant dense<0.000000e+00> : vector<8x128xf32>
    %2 = tpu.matmul %0, %1, %cst {dimension_numbers = #tpu.dot_dimension_numbers<[1], [0], [0], [1], [0, 0, 1, 1], [], []>} : vector<8x32xf32>, vector<32x128xf32>, vector<8x128xf32> -> vector<8x128xf32>
    %c0_3 = arith.constant 0 : index
    %c0_4 = arith.constant 0 : index
    %3 = vector.load %arg4[%c0_3, %c0_4] : memref<8x1xf32, #tpu.memory_space<vmem>>, vector<8x1xf32>
    %c0_5 = arith.constant 0 : index
    %c0_6 = arith.constant 0 : index
    %4 = vector.load %arg5[%c0_5, %c0_6] : memref<1x128xf32, #tpu.memory_space<vmem>>, vector<1x128xf32>
    %5 = vector.broadcast %3 : vector<8x1xf32> to vector<8x128xf32>
    %6 = vector.broadcast %4 : vector<1x128xf32> to vector<8x128xf32>
    %7 = arith.mulf %5, %6 : vector<8x128xf32>
    %cst_7 = arith.constant 2.500000e-19 : f32
    %8 = vector.broadcast %cst_7 : f32 to vector<8x128xf32>
    %9 = arith.maximumf %7, %8 : vector<8x128xf32>
    %10 = math.rsqrt %9 : vector<8x128xf32>
    %11 = arith.mulf %2, %10 : vector<8x128xf32>
    %c0_8 = arith.constant 0 : index
    %c0_9 = arith.constant 0 : index
    %12 = vector.load %arg6[%c0_8, %c0_9] : memref<8x128xf32, #tpu.memory_space<vmem>>, vector<8x128xf32>
    tpu.vector_store %arg6[%c0_8, %c0_9], %11 {strides = array<i32>} : memref<8x128xf32, #tpu.memory_space<vmem>>, vector<8x128xf32>,
    return
  }
  func.func @transform_0(%arg0: i32, %arg1: i32) -> (i32, i32) {
    %c0_i32 = arith.constant 0 : i32
    %c0_i32_0 = arith.constant 0 : i32
    return %arg0, %c0_i32 : i32, i32
  }
  func.func @transform_1(%arg0: i32, %arg1: i32) -> (i32, i32) {
    %c0_i32 = arith.constant 0 : i32
    %c0_i32_0 = arith.constant 0 : i32
    return %c0_i32, %arg1 : i32, i32
  }
  func.func @transform_2(%arg0: i32, %arg1: i32) -> (i32, i32) {
    %c0_i32 = arith.constant 0 : i32
    %c0_i32_0 = arith.constant 0 : i32
    return %arg0, %c0_i32 : i32, i32
  }
  func.func @transform_3(%arg0: i32, %arg1: i32) -> (i32, i32) {
    %c0_i32 = arith.constant 0 : i32
    %c0_i32_0 = arith.constant 0 : i32
    return %c0_i32, %arg1 : i32, i32
  }
  func.func @transform_4(%arg0: i32, %arg1: i32) -> (i32, i32) {
    %c0_i32 = arith.constant 0 : i32
    return %arg0, %arg1 : i32, i32
  }
}

</mosaic_0001>

<llo_original>
// kernel: tpu_custom_call.1
$region0: #{tpu_custom_call.1}
  #allocation0 [shape = 'u32[]', space=smem, size = 0x4, offset = 0x4, fixed_abs, tag = 'smem constant byte address 0x4 - core index']
  #allocation1 [shape = 'u32[72,128]{1,0:T(1,128)}', space=vmem, size = 0x9000, scoped, tag = 'internal scratch']
  %s0 = inlined_call_operand.vmem [shape: f32[8,32], index: 0, kind: input, shape index: {}]
  %s1 = inlined_call_operand.hbm [shape: f32[32,128], index: 1, kind: input, shape index: {}]
  %s2 = inlined_call_operand.vmem [shape: f32[8,1], index: 2, kind: input, shape index: {}]
  %s3 = inlined_call_operand.vmem [shape: f32[1,128], index: 3, kind: input, shape index: {}]
  %s4 = inlined_call_operand.hbm [shape: f32[8,128], index: 4, kind: output, shape index: {}]
  %s5 = sld [smem:[#allocation0]]
  $region30: #{tpu_custom_call.1} parent=0
    _
  %s7 = ssub.s32 1, %s5
  %s8 = scalar_select 0, %s7, %s5
  $region1: #{tpu_custom_call.1} parent=0
    #allocation2 [shape = 'u8[16384]{0}', space=vmem, size = 0x4000, scoped, tag = 'input window, operand 1, single buffered']
    #allocation3 [shape = 's32[1]{0}', space=sflag, size = 0x4, scoped, tag = 'scoped memory for tpu_custom_call.1']
    #allocation4 [shape = 's32[1]{0}', space=sflag, size = 0x4, scoped, tag = 'scoped memory for tpu_custom_call.1']
    #allocation5 [shape = 'u8[4096]{0}', space=vmem, size = 0x1000, scoped, tag = 'output window, operand 0, single buffered']
    %9 = vsyncpa [#allocation3], 0
    %10 = vsyncpa [#allocation4], 0
    // Predicated region
    $region2: #{tpu_custom_call.1} parent=1 // pred_check
      _
    $region3: #{tpu_custom_call.1} parent=1 // pred_check_branch
      %12 = sbr.rel (0) target = $region5
    $region4: #{tpu_custom_call.1} parent=1 // pred_region
      _
    $region5: #{tpu_custom_call.1} parent=1 // pred_fallthru
      _
    // Predicated region
    $region6: #{tpu_custom_call.1} parent=1 // pred_check
      _
    $region7: #{tpu_custom_call.1} parent=1 // pred_check_branch
      %14 = sbr.rel (0) target = $region9
    $region8: #{tpu_custom_call.1} parent=1 // pred_region
      %16 = vsyncadd [#allocation3], 0
      %s17 = sshll.u32 %s1, 4
      %s18 = int_to_ptr.hbm [resolvable:$true] %s17
      %s19 = sshll.u32 [#allocation2], 4
      %s20 = int_to_ptr.vmem [resolvable:$true] %s19
      %25 = dma.hbm_to_vmem [thread:$0]  %s18, 512, %s20, [#allocation3], 128, 128, 8
    $region9: #{tpu_custom_call.1} parent=1 // pred_fallthru
      _
    // Predicated region
    $region10: #{tpu_custom_call.1} parent=1 // pred_check
      _
    $region11: #{tpu_custom_call.1} parent=1 // pred_check_branch
      %27 = sbr.rel (0) target = $region13
    $region12: #{tpu_custom_call.1} parent=1 // pred_region
      _
    $region13: #{tpu_custom_call.1} parent=1 // pred_fallthru
      _
    // Predicated region
    $region14: #{tpu_custom_call.1} parent=1 // pred_check
      _
    $region15: #{tpu_custom_call.1} parent=1 // pred_check_branch
      %29 = sbr.rel (0) target = $region17
    $region16: #{tpu_custom_call.1} parent=1 // pred_region
      _
    $region17: #{tpu_custom_call.1} parent=1 // pred_fallthru
      _
    // Predicated region
    $region18: #{tpu_custom_call.1} parent=1 // pred_check
      _
    $region19: #{tpu_custom_call.1} parent=1 // pred_check_branch
      %31 = sbr.rel (0) target = $region21
    $region20: #{tpu_custom_call.1} parent=1 // pred_region
      %33 = dma.done [#allocation3], 512
    $region21: #{tpu_custom_call.1} parent=1 // pred_fallthru
      _
    %v34 = vld [vmem:[%s0] sm:$0xff]
    %v35 = vld [vmem:[#allocation2] sm:$0xff]
    %v36 = vld [vmem:[#allocation2 + $0x8] sm:$0xff]
    %v37 = vld [vmem:[#allocation2 + $0x10] sm:$0xff]
    %v38 = vld [vmem:[#allocation2 + $0x18] sm:$0xff]
    %vm39 = vcmask 261120
    %v41 = vsel %vm39, %v34, 0
    %43 = vmatpush.msra.mxu0 0.0
    %44 = vmatpush.msra.mxu0 0.0
    %45 = vmatpush.msra.mxu0 0.0
    %46 = vmatpush.msra.mxu0 0.0
    %47 = vmatpush.msra.mxu0 0.0
    %48 = vmatpush.msra.mxu0 0.0
    %49 = vmatpush.msra.mxu0 0.0
    %50 = vmatpush.msra.mxu0 0.0
    %51 = vmatpush.msra.mxu0 0.0
    %52 = vmatpush.msra.mxu0 0.0
    %53 = vmatpush.msra.mxu0 0.0
    %54 = vmatpush.msra.mxu0 0.0
    %55 = vmatpush.msra.mxu0 %v38
    %56 = vmatpush.msra.mxu0 %v37
    %57 = vmatpush.msra.mxu0 %v36
    %58 = vmatpush.msra.mxu0 %v35
    %59 = vmatmul.f32.gmra.mxu0 %v41
    %v60 = vpop.f32.mrf.mxu0
    %v61 = vadd.f32 0.0, %v60
    %62 = vdwg.mxu0
    %v63 = vld [vmem:[%s2] sm:$0xff]
    %v64 = vld [vmem:[%s3] sm:$0x1]
    %66 = vset.pattern.permute.xlu0 0
    %67 = vperm.xlu0 %66, %v63
    %v68 = vpop.permute.xlu0 %67
    %v71 = vperm.slane %v64, 0
    %v73 = vmul.f32 %v68, %v71
    %v74 = vmax.f32 %v73, 2.5e-19
    %v75 = vrsqrt.pop %v74
    %v76 = vmul.f32 %v75, %v74
    %v77 = vmul.f32 %v76, %v75
    %v78 = vmul.f32 0.5, %v77
    %v79 = vsub.f32 1.5, %v78
    %v80 = vmul.f32 %v75, %v79
    %vm81 = vweird.f32 %v74
    %vm82 = vweird.f32 %v75
    %vm83 = vmor %vm81, %vm82
    %v84 = vsel %vm83, %v75, %v80
    %v85 = vmul.f32 %v61, %v84
    %86 = vst [vmem:[#allocation5] sm:$0xff] %v85
    // Predicated region
    $region22: #{tpu_custom_call.1} parent=1 // pred_check
      _
    $region23: #{tpu_custom_call.1} parent=1 // pred_check_branch
      %88 = sbr.rel (0) target = $region25
    $region24: #{tpu_custom_call.1} parent=1 // pred_region
      %90 = vsyncadd [#allocation4], 0
      %s92 = sshll.u32 [#allocation5], 4
      %s93 = int_to_ptr.vmem [resolvable:$true] %s92
      %s94 = sshll.u32 %s4, 4
      %s95 = int_to_ptr.hbm [resolvable:$true] %s94
      %97 = dma.vmem_to_hbm [thread:$0]  %s93, 128, %s95, [#allocation4]
    $region25: #{tpu_custom_call.1} parent=1 // pred_fallthru
      _
    // Predicated region
    $region26: #{tpu_custom_call.1} parent=1 // pred_check
      _
    $region27: #{tpu_custom_call.1} parent=1 // pred_check_branch
      %99 = sbr.rel (0) target = $region29
    $region28: #{tpu_custom_call.1} parent=1 // pred_region
      %101 = dma.done [#allocation4], 128
    $region29: #{tpu_custom_call.1} parent=1 // pred_fallthru
      _
    %102 = vsyncpa [#allocation3], 1
    %103 = vsyncpa [#allocation4], 1

</llo_original>
